<compile_context>
chip_gen: v7x
topology: tpu7x:2x2x1
jax: 0.10.0
libtpu: 0.0.40
codegen_flags: <defaults>
</compile_context>

<pallas_src>
import jax
import jax.numpy as jnp
from jax.experimental import pallas as pl
from jax.experimental.pallas import tpu as pltpu


# ----------------------------- Pallas kernel --------------------------------

def _prelu_conv1x1_kernel(x_ref, w_ref, b_ref, a_ref, o_ref):
    # x_ref: (1, C, TN) VMEM    w_ref: (O, C) VMEM    b_ref: (O, 1) VMEM
    # a_ref: (1,)       SMEM    o_ref: (1, O, TN) VMEM
    x = x_ref[0]                                    # (C, TN), lanes = spatial
    a = a_ref[0]                                    # scalar PReLU slope
    x = jnp.where(x >= 0, x, a * x)                 # PReLU (single parameter)
    o_ref[0] = (
        jnp.dot(w_ref[...], x, preferred_element_type=jnp.float32)  # (O, TN)
        + b_ref[...]                                                 # (O, 1)
    )


def prelu_conv1x1_ncl(x, w_oc, bias_o, prelu_a, *, max_tn=512):
    """Fused PReLU + pointwise (1x1) conv.

    x: (B, C, L) f32  ->  (B, O, L) f32, computed as (O,C) @ (C,TN) per tile so
    the output block is lane-dense along L.
    """
    B, C, L = x.shape
    O = w_oc.shape[0]

    # Tile of the spatial axis: either the full extent (always legal) or a
    # multiple of 128 (Pallas masks the ragged tail block), never jnp.pad.
    tn = L if L <= max_tn else max_tn
    grid = (B, pl.cdiv(L, tn))

    return pl.pallas_call(
        _prelu_conv1x1_kernel,
        out_shape=jax.ShapeDtypeStruct((B, O, L), jnp.float32),
        grid_spec=pltpu.PrefetchScalarGridSpec(
            num_scalar_prefetch=0,
            grid=grid,
            in_specs=[
                pl.BlockSpec((1, C, tn), lambda b, l: (b, 0, l)),
                pl.BlockSpec((O, C), lambda b, l: (0, 0)),
                pl.BlockSpec((O, 1), lambda b, l: (0, 0)),
                pl.BlockSpec(memory_space=pltpu.MemorySpace.SMEM),
            ],
            out_specs=pl.BlockSpec((1, O, tn), lambda b, l: (b, 0, l)),
        ),
        compiler_params=pltpu.CompilerParams(
            dimension_semantics=("parallel", "parallel")
        ),
    )(x, w_oc, bias_o.reshape(O, 1), prelu_a.reshape(1))


# --------------------------- glue (plain JAX) --------------------------------

def pad_segment(x, segment_size):
    B, D, L = x.shape
    stride = segment_size // 2
    rest = segment_size - (stride + L % segment_size) % segment_size
    if rest > 0:
        x = jnp.concatenate([x, jnp.zeros((B, D, rest), x.dtype)], axis=2)
    pad_aux = jnp.zeros((B, D, stride), x.dtype)
    x = jnp.concatenate([pad_aux, x, pad_aux], axis=2)
    return x, rest


def chunk_padded(x, segment_size):
    """Overlap-segment an already-padded (B, D, L) tensor -> (B, D, S, 2K)."""
    B, D, L = x.shape
    stride = segment_size // 2
    seg1 = x[:, :, :-stride].reshape(B, D, -1, segment_size)
    seg2 = x[:, :, stride:].reshape(B, D, -1, segment_size)
    segments = jnp.concatenate([seg1, seg2], axis=3).reshape(
        B, D, -1, segment_size)
    return jnp.swapaxes(segments, 2, 3)   # (B, D, segment_size, 2K)


def create_chunks(x, segment_size):
    x, rest = pad_segment(x, segment_size)
    return chunk_padded(x, segment_size), rest


def init_separator_params(key, feature_dim, output_dim):
    k1, k2 = jax.random.split(key, 2)
    # Conv2d(feature_dim, output_dim, 1): weight (O, C, 1, 1) -> (O, C), bias (O,)
    w_oc = jax.random.normal(k1, (output_dim, feature_dim), jnp.float32) * 0.1
    b_o = jax.random.normal(k2, (output_dim,), jnp.float32) * 0.1
    a = jnp.array(0.25, jnp.float32)          # PReLU default init
    return {"w_oc": w_oc, "b": b_o, "a": a}


def separator_forward(x, params, segment_size):
    """x: (B, feature_dim, seq_len) f32 -> (B, output_dim, segment_size, 2K).

    The pointwise PReLU+conv is applied before chunking (exact: the conv is
    1x1 and chunking only gathers existing, already-zero-padded positions),
    so the kernel and the chunk copy both touch the non-duplicated tensor.
    """
    x_pad, _rest = pad_segment(x, segment_size)                    # (B, C, Lp)
    y = prelu_conv1x1_ncl(x_pad, params["w_oc"], params["b"], params["a"])
    return chunk_padded(y, segment_size)                           # (B, O, S, 2K)


# --------------------------------- main --------------------------------------

if __name__ == "__main__":
    # Small shapes consistent with the module:
    #   input_dim unused in forward, feature_dim=16, hidden_dim=32 (dead code),
    #   output_dim=8, segment_size=8.
    B, FEATURE_DIM, SEQ_LEN = 2, 16, 30
    OUTPUT_DIM, SEGMENT_SIZE = 8, 8

    key = jax.random.PRNGKey(0)
    k_x, k_p = jax.random.split(key)
    x = jax.random.normal(k_x, (B, FEATURE_DIM, SEQ_LEN), jnp.float32)
    params = init_separator_params(k_p, FEATURE_DIM, OUTPUT_DIM)

    out = separator_forward(x, params, SEGMENT_SIZE)
    out = jax.block_until_ready(out)

    # Pure-JAX reference following the ORIGINAL op order (chunk, then
    # PReLU + 1x1 conv), to validate the pre-chunk-conv restructuring.
    segs, _ = create_chunks(x, SEGMENT_SIZE)                       # (B, C, S, K2)
    pr = jnp.where(segs >= 0, segs, params["a"] * segs)
    ref = jnp.einsum("bcsk,oc->bosk", pr, params["w_oc"]) + \
        params["b"][None, :, None, None]

    assert out.shape == ref.shape, (out.shape, ref.shape)
    assert jnp.allclose(out, ref, atol=1e-4, rtol=1e-4), \
        float(jnp.max(jnp.abs(out - ref)))
    print("KERNEL_OK")
</pallas_src>

<mosaic_0001>
module attributes {stable_mosaic.version = 11 : i64} {
  func.func @_prelu_conv1x1_kernel(%arg0: i32, %arg1: i32, %arg2: memref<1x16x44xf32, #tpu.memory_space<vmem>>, %arg3: memref<8x16xf32, #tpu.memory_space<vmem>>, %arg4: memref<8x1xf32, #tpu.memory_space<vmem>>, %arg5: memref<1xf32, #tpu.memory_space<smem>>, %arg6: memref<1x8x44xf32, #tpu.memory_space<vmem>>) attributes {dimension_semantics = [#tpu.dimension_semantics<parallel>, #tpu.dimension_semantics<parallel>], iteration_bounds = array<i64: 2, 1>, scalar_prefetch = 0 : i64, scratch_operands = 0 : i64, tpu.core_type = #tpu.core_type<tc>, window_params = [{transform_indices = @transform_0, window_bounds = array<i64: 1, 16, 44>}, {pipeline_mode = #tpu.pipeline_mode<synchronous>, transform_indices = @transform_1, window_bounds = array<i64: 8, 16>}, {pipeline_mode = #tpu.pipeline_mode<synchronous>, transform_indices = @transform_2, window_bounds = array<i64: 8, 1>}, {transform_indices = @transform_3, window_bounds = array<i64: 1>}, {transform_indices = @transform_4, window_bounds = array<i64: 1, 8, 44>}]} {
    %c0 = arith.constant 0 : index
    %c0_0 = arith.constant 0 : index
    %c0_1 = arith.constant 0 : index
    %0 = vector.load %arg2[%c0, %c0_0, %c0_1] : memref<1x16x44xf32, #tpu.memory_space<vmem>>, vector<1x16x44xf32>
    %1 = vector.shape_cast %0 : vector<1x16x44xf32> to vector<16x44xf32>
    %c0_2 = arith.constant 0 : index
    %2 = memref.load %arg5[%c0_2] : memref<1xf32, #tpu.memory_space<smem>>
    %cst = arith.constant 0.000000e+00 : f32
    %3 = vector.broadcast %cst : f32 to vector<16x44xf32>
    %4 = arith.cmpf oge, %1, %3 : vector<16x44xf32>
    %5 = vector.broadcast %2 : f32 to vector<16x44xf32>
    %6 = arith.mulf %5, %1 : vector<16x44xf32>
    %7 = arith.select %4, %1, %6 : vector<16x44xi1>, vector<16x44xf32>
    %c0_3 = arith.constant 0 : index
    %c0_4 = arith.constant 0 : index
    %8 = vector.load %arg3[%c0_3, %c0_4] : memref<8x16xf32, #tpu.memory_space<vmem>>, vector<8x16xf32>
    %cst_5 = arith.constant dense<0.000000e+00> : vector<8x44xf32>
    %9 = tpu.matmul %8, %7, %cst_5 {dimension_numbers = #tpu.dot_dimension_numbers<[1], [0], [0], [1], [0, 0, 1, 1], [], []>} : vector<8x16xf32>, vector<16x44xf32>, vector<8x44xf32> -> vector<8x44xf32>
    %c0_6 = arith.constant 0 : index
    %c0_7 = arith.constant 0 : index
    %10 = vector.load %arg4[%c0_6, %c0_7] : memref<8x1xf32, #tpu.memory_space<vmem>>, vector<8x1xf32>
    %11 = vector.broadcast %10 : vector<8x1xf32> to vector<8x44xf32>
    %12 = arith.addf %9, %11 : vector<8x44xf32>
    %c0_8 = arith.constant 0 : index
    %c0_9 = arith.constant 0 : index
    %c0_10 = arith.constant 0 : index
    %13 = vector.load %arg6[%c0_8, %c0_9, %c0_10] : memref<1x8x44xf32, #tpu.memory_space<vmem>>, vector<1x8x44xf32>
    %14 = vector.shape_cast %13 : vector<1x8x44xf32> to vector<8x44xf32>
    %15 = vector.shape_cast %12 : vector<8x44xf32> to vector<1x8x44xf32>
    tpu.vector_store %arg6[%c0_8, %c0_9, %c0_10], %15 {strides = array<i32>} : memref<1x8x44xf32, #tpu.memory_space<vmem>>, vector<1x8x44xf32>,
    return
  }
  func.func @transform_0(%arg0: i32, %arg1: i32) -> (i32, i32, i32) {
    %c0_i32 = arith.constant 0 : i32
    %c0_i32_0 = arith.constant 0 : i32
    return %arg0, %c0_i32, %arg1 : i32, i32, i32
  }
  func.func @transform_1(%arg0: i32, %arg1: i32) -> (i32, i32) {
    %c0_i32 = arith.constant 0 : i32
    %c0_i32_0 = arith.constant 0 : i32
    %c0_i32_1 = arith.constant 0 : i32
    return %c0_i32, %c0_i32_0 : i32, i32
  }
  func.func @transform_2(%arg0: i32, %arg1: i32) -> (i32, i32) {
    %c0_i32 = arith.constant 0 : i32
    %c0_i32_0 = arith.constant 0 : i32
    %c0_i32_1 = arith.constant 0 : i32
    return %c0_i32, %c0_i32_0 : i32, i32
  }
  func.func @transform_3(%arg0: i32, %arg1: i32) -> i32 {
    %c0_i32 = arith.constant 0 : i32
    %c0_i32_0 = arith.constant 0 : i32
    return %c0_i32 : i32
  }
  func.func @transform_4(%arg0: i32, %arg1: i32) -> (i32, i32, i32) {
    %c0_i32 = arith.constant 0 : i32
    %c0_i32_0 = arith.constant 0 : i32
    return %arg0, %c0_i32, %arg1 : i32, i32, i32
  }
}

</mosaic_0001>

<llo_original>
// kernel: tpu_custom_call.1
$region0: #{tpu_custom_call.1}
  #allocation0 [shape = 'u32[]', space=smem, size = 0x4, offset = 0x4, fixed_abs, tag = 'smem constant byte address 0x4 - core index']
  #allocation1 [shape = 'u32[144,128]{1,0:T(1,128)}', space=vmem, size = 0x12000, scoped, tag = 'internal scratch']
  #allocation2 [shape = 'f32[1]{0:T(128)S(6)}', space=smem, size = 0x200, scoped, tag = 'scoped memory for tpu_custom_call.1']
  %s0 = inlined_call_operand.hbm [shape: f32[2,16,44], index: 0, kind: input, shape index: {}]
  %s1 = inlined_call_operand.vmem [shape: f32[8,16], index: 1, kind: input, shape index: {}]
  %s2 = inlined_call_operand.vmem [shape: f32[8,1], index: 2, kind: input, shape index: {}]
  %s3 = inlined_call_operand.<no memory space> [shape: f32[1], index: 3, kind: input, shape index: {}]
  %s4 = inlined_call_operand.hbm [shape: f32[2,8,44], index: 4, kind: output, shape index: {}]
  %s5 = sld [smem:[#allocation0]]
  $region53: #{tpu_custom_call.1} parent=0
    _
  %s7 = ssub.s32 1, %s5
  %s8 = scalar_select 0, %s7, %s5
  %9 = sst [smem:[#allocation2]] %s3
  $region1: #{tpu_custom_call.1} parent=0
    #allocation3 [shape = 'u8[16384]{0}', space=vmem, size = 0x4000, scoped, tag = 'input window, operand 0']
    #allocation4 [shape = 's32[2]{0}', space=sflag, size = 0x8, scoped, tag = 'scoped memory for tpu_custom_call.1']
    #allocation5 [shape = 's32[2]{0}', space=sflag, size = 0x8, scoped, tag = 'scoped memory for tpu_custom_call.1']
    #allocation6 [shape = 'u8[8192]{0}', space=vmem, size = 0x2000, scoped, tag = 'output window, operand 0']
    %10 = vsyncpa [#allocation4], 0
    %s11 = scalar_lea.sflag [#allocation4], 1
    %12 = vsyncpa %s11, 0
    %13 = vsyncpa [#allocation5], 0
    %s14 = scalar_lea.sflag [#allocation5], 1
    %15 = vsyncpa %s14, 0
    loop: start=0, step=1, limit=4
    $region2: #{tpu_custom_call.1} parent=1 // loop_pre_header
      _
    $region3: #{tpu_custom_call.1} parent=1 // loop_header
      %s17 = sphi 0, %s21
      %p18 = scmp.ge.s32.totalorder %s17, 4
      %s24 = sphi 0, %s36
      %s25 = sphi 0, %s32
      %s26 = sphi 0, %s24
      %s27 = sphi 0, %s25
      %s28 = sphi 0, %s26
      %s29 = sphi 0, %s27
      %s41 = sphi 0, %s43
      %s44 = sphi 0, %s41
      %s45 = sphi 0, %s44
      %s61 = sphi 0, %s45
      %s65 = sphi 0, %s65
      %s67 = sphi 0, %s65
      %s68 = sphi 0, %s67
      %s82 = sphi 0, %s68
      %s86 = sphi 0, %s86
      %s88 = sphi 0, %s86
      %s89 = sphi 0, %s88
      %s103 = sphi 0, %s89
      %s107 = sphi 0, %s107
      %s109 = sphi 0, %s107
      %s110 = sphi 0, %s109
      %s124 = sphi 0, %s110
      %s132 = sphi 0, %s134
      %s135 = sphi 0, %s132
      %s136 = sphi 0, %s135
      %s152 = sphi 0, %s136
    $region4: #{tpu_custom_call.1} parent=1 // loop_header_branch
      %20 = sbr.rel (%p18) target = $region8
    $region5: #{tpu_custom_call.1} parent=1 // loop_body
      %s22 = ssub.s32 %s17, 1
      %s23 = ssub.s32 %s17, 2
      %s30 = sadd.s32 1, %s25
      %p31 = scmp.ge.s32.totalorder %s30, 1
      %s32 = scalar_select %p31, 0, %s30
      %s33 = sadd.s32 1, %s24
      %s34 = scalar_select %p31, %s33, %s24
      %p35 = scmp.ge.s32.totalorder %s34, 2
      %s36 = scalar_select %p35, 0, %s34
      %s37 = ssub.s32 %s24, %s36
      %s38 = ssub.s32 %s25, %s32
      %s39 = sor.u32 %s37, %s38
      %p40 = scmp.eq.s32.totalorder %s39, 0
      %s42 = sadd.s32 %s41, 1
      %s43 = scalar_select %p40, %s41, %s42
      %p46 = pneg %p40
      %p47 = scmp.eq.s32.totalorder %s17, 1
      %p48 = por %p46, %p47
      %p49 = scmp.ne.s32.totalorder %s41, %s44
      %p50 = scmp.eq.s32.totalorder %s17, 0
      %p51 = por %p49, %p50
      %p52 = scmp.ne.s32.totalorder %s41, %s44
      %p53 = scmp.eq.s32.totalorder %s22, 1
      %p54 = por %p52, %p53
      %p55 = scmp.ne.s32.totalorder %s44, %s45
      %p56 = scmp.eq.s32.totalorder %s22, 0
      %p57 = por %p55, %p56
      %p58 = scmp.ne.s32.totalorder %s44, %s45
      %p59 = scmp.eq.s32.totalorder %s23, 1
      %p60 = por %p58, %p59
      %p62 = scmp.ne.s32.totalorder %s45, %s61
      %p63 = scmp.eq.s32.totalorder %s23, 0
      %p64 = por %p62, %p63
      %s66 = sadd.s32 %s65, 1
      %p69 = scmp.eq.s32.totalorder %s17, 1
      %p70 = scmp.ne.s32.totalorder %s65, %s67
      %p71 = scmp.eq.s32.totalorder %s17, 0
      %p72 = por %p70, %p71
      %p73 = scmp.ne.s32.totalorder %s65, %s67
      %p74 = scmp.eq.s32.totalorder %s22, 1
      %p75 = por %p73, %p74
      %p76 = scmp.ne.s32.totalorder %s67, %s68
      %p77 = scmp.eq.s32.totalorder %s22, 0
      %p78 = por %p76, %p77
      %p79 = scmp.ne.s32.totalorder %s67, %s68
      %p80 = scmp.eq.s32.totalorder %s23, 1
      %p81 = por %p79, %p80
      %p83 = scmp.ne.s32.totalorder %s68, %s82
      %p84 = scmp.eq.s32.totalorder %s23, 0
      %p85 = por %p83, %p84
      %s87 = sadd.s32 %s86, 1
      %p90 = scmp.eq.s32.totalorder %s17, 1
      %p91 = scmp.ne.s32.totalorder %s86, %s88
      %p92 = scmp.eq.s32.totalorder %s17, 0
      %p93 = por %p91, %p92
      %p94 = scmp.ne.s32.totalorder %s86, %s88
      %p95 = scmp.eq.s32.totalorder %s22, 1
      %p96 = por %p94, %p95
      %p97 = scmp.ne.s32.totalorder %s88, %s89
      %p98 = scmp.eq.s32.totalorder %s22, 0
      %p99 = por %p97, %p98
      %p100 = scmp.ne.s32.totalorder %s88, %s89
      %p101 = scmp.eq.s32.totalorder %s23, 1
      %p102 = por %p100, %p101
      %p104 = scmp.ne.s32.totalorder %s89, %s103
      %p105 = scmp.eq.s32.totalorder %s23, 0
      %p106 = por %p104, %p105
      %s108 = sadd.s32 %s107, 1
      %p111 = scmp.eq.s32.totalorder %s17, 1
      %p112 = scmp.ne.s32.totalorder %s107, %s109
      %p113 = scmp.eq.s32.totalorder %s17, 0
      %p114 = por %p112, %p113
      %p115 = scmp.ne.s32.totalorder %s107, %s109
      %p116 = scmp.eq.s32.totalorder %s22, 1
      %p117 = por %p115, %p116
      %p118 = scmp.ne.s32.totalorder %s109, %s110
      %p119 = scmp.eq.s32.totalorder %s22, 0
      %p120 = por %p118, %p119
      %p121 = scmp.ne.s32.totalorder %s109, %s110
      %p122 = scmp.eq.s32.totalorder %s23, 1
      %p123 = por %p121, %p122
      %p125 = scmp.ne.s32.totalorder %s110, %s124
      %p126 = scmp.eq.s32.totalorder %s23, 0
      %p127 = por %p125, %p126
      %s128 = ssub.s32 %s24, %s36
      %s129 = ssub.s32 %s25, %s32
      %s130 = sor.u32 %s128, %s129
      %p131 = scmp.eq.s32.totalorder %s130, 0
      %s133 = sadd.s32 %s132, 1
      %s134 = scalar_select %p131, %s132, %s133
      %p137 = pneg %p131
      %p138 = scmp.eq.s32.totalorder %s17, 1
      %p139 = por %p137, %p138
      %p140 = scmp.ne.s32.totalorder %s132, %s135
      %p141 = scmp.eq.s32.totalorder %s17, 0
      %p142 = por %p140, %p141
      %p143 = scmp.ne.s32.totalorder %s132, %s135
      %p144 = scmp.eq.s32.totalorder %s22, 1
      %p145 = por %p143, %p144
      %p146 = scmp.ne.s32.totalorder %s135, %s136
      %p147 = scmp.eq.s32.totalorder %s22, 0
      %p148 = por %p146, %p147
      %p149 = scmp.ne.s32.totalorder %s135, %s136
      %p150 = scmp.eq.s32.totalorder %s23, 1
      %p151 = por %p149, %p150
      %p153 = scmp.ne.s32.totalorder %s136, %s152
      %p154 = scmp.eq.s32.totalorder %s23, 0
      %p155 = por %p153, %p154
      %p156 = scmp.le.s32.totalorder 1, %s17
      %p157 = scmp.lt.s32.totalorder %s17, 3
      %p158 = pnand %p156, %p157
      %p159 = pneg %p158
      // Predicated region
      $region9: #{tpu_custom_call.1} parent=5 // pred_check
        _
      $region10: #{tpu_custom_call.1} parent=5 // pred_check_branch
        %161 = sbr.rel (%p158) target = $region12
      $region11: #{tpu_custom_call.1} parent=5 // pred_region
        %s162 = ssub.s32 %s17, 1
        // Predicated region
        $region13: #{tpu_custom_call.1} parent=11 // pred_check
          %p163 = pneg %p78
        $region14: #{tpu_custom_call.1} parent=11 // pred_check_branch
          %165 = sbr.rel (%p163) target = $region16
        $region15: #{tpu_custom_call.1} parent=11 // pred_region
          _
        $region16: #{tpu_custom_call.1} parent=11 // pred_fallthru
          _
        // Predicated region
        $region17: #{tpu_custom_call.1} parent=11 // pred_check
          %p166 = pneg %p99
        $region18: #{tpu_custom_call.1} parent=11 // pred_check_branch
          %168 = sbr.rel (%p166) target = $region20
        $region19: #{tpu_custom_call.1} parent=11 // pred_region
          _
        $region20: #{tpu_custom_call.1} parent=11 // pred_fallthru
          _
        // Predicated region
        $region21: #{tpu_custom_call.1} parent=11 // pred_check
          %p169 = pneg %p120
        $region22: #{tpu_custom_call.1} parent=11 // pred_check_branch
          %171 = sbr.rel (%p169) target = $region24
        $region23: #{tpu_custom_call.1} parent=11 // pred_region
          _
        $region24: #{tpu_custom_call.1} parent=11 // pred_fallthru
          _
      $region12: #{tpu_custom_call.1} parent=5 // pred_fallthru
        _
      %p172 = scmp.lt.s32.totalorder %s17, 2
      // Predicated region
      $region25: #{tpu_custom_call.1} parent=5 // pred_check
        %p173 = pneg %p172
      $region26: #{tpu_custom_call.1} parent=5 // pred_check_branch
        %175 = sbr.rel (%p173) target = $region28
      $region27: #{tpu_custom_call.1} parent=5 // pred_region
        // Predicated region
        $region29: #{tpu_custom_call.1} parent=27 // pred_check
          %p176 = pneg %p51
        $region30: #{tpu_custom_call.1} parent=27 // pred_check_branch
          %178 = sbr.rel (%p176) target = $region32
        $region31: #{tpu_custom_call.1} parent=27 // pred_region
          %s179 = sand.u32 %s41, 1
          %s180 = scalar_lea.sflag [#allocation4], %s179
          %s181 = sand.u32 %s41, 1
          %s182 = smul.addr %s181, 16
          %s183 = scalar_lea.vmem [#allocation3], %s182
          %s185 = ssub.s32 256, 256
          %186 = vsyncadd %s180, %s185
          %s187 = smul.addr %s24, 2
          %s188 = sadd.s32 %s25, %s187
          %s189 = smul.addr %s188, 128
          %s190 = scalar_lea.hbm %s0, %s189
          %s191 = sshll.u32 %s183, 4
          %s192 = int_to_ptr.vmem [resolvable:$true] %s191
          %197 = dma.hbm_to_vmem [thread:$0]  %s190, 256, %s192, %s180, 128, 128, 8
        $region32: #{tpu_custom_call.1} parent=27 // pred_fallthru
          _
      $region28: #{tpu_custom_call.1} parent=5 // pred_fallthru
        _
      %p198 = scmp.le.s32.totalorder 1, %s17
      %p199 = scmp.lt.s32.totalorder %s17, 3
      %p200 = pnand %p198, %p199
      %p201 = pneg %p200
      // Predicated region
      $region33: #{tpu_custom_call.1} parent=5 // pred_check
        _
      $region34: #{tpu_custom_call.1} parent=5 // pred_check_branch
        %203 = sbr.rel (%p200) target = $region36
      $region35: #{tpu_custom_call.1} parent=5 // pred_region
        %s204 = ssub.s32 %s17, 1
        %s205 = sand.u32 %s44, 1
        %s206 = scalar_lea.sflag [#allocation4], %s205
        %s207 = sand.u32 %s44, 1
        %s208 = smul.addr %s207, 16
        %s209 = scalar_lea.vmem [#allocation3], %s208
        // Predicated region
        $region37: #{tpu_custom_call.1} parent=35 // pred_check
          %p210 = pneg %p57
        $region38: #{tpu_custom_call.1} parent=35 // pred_check_branch
          %212 = sbr.rel (%p210) target = $region40
        $region39: #{tpu_custom_call.1} parent=35 // pred_region
          %213 = dma.done %s206, 256
        $region40: #{tpu_custom_call.1} parent=35 // pred_fallthru
          _
        %s214 = sand.u32 %s44, 1
        %s215 = scalar_lea.sflag [#allocation4], %s214
        %s216 = sand.u32 %s44, 1
        %s217 = smul.addr %s216, 16
        %s218 = scalar_lea.vmem [#allocation3], %s217
        %p219 = pneg %p57
        %p220 = pneg %p54
        %p221 = pneg %p78
        %p222 = pneg %p75
        %p223 = pneg %p99
        %p224 = pneg %p96
        %p225 = pneg %p120
        %p226 = pneg %p117
        %p227 = pneg %p148
        %p228 = pneg %p145
        %s229 = sand.u32 %s135, 1
        %s230 = scalar_lea.sflag [#allocation5], %s229
        %s231 = sand.u32 %s135, 1
        %s232 = smul.addr %s231, 8
        %s233 = scalar_lea.vmem [#allocation6], %s232
        %v234 = vld [vmem:[%s209] sm:$0xff]
        %v235 = vld [vmem:[%s209 + $0x8] sm:$0xff]
        %s236 = sld [smem:[#allocation2]]
        %vm237 = vcmp.ge.f32.partialorder %v234, 0.0
        %vm238 = vcmp.ge.f32.partialorder %v235, 0.0
        %v239 = vstv %s236
        %v240 = vmul.f32 %v239, %v234
        %v241 = vmul.f32 %v239, %v235
        %v242 = vsel %vm237, %v234, %v240
        %v243 = vsel %vm238, %v235, %v241
        %v244 = vld [vmem:[%s1] sm:$0xff]
        %v245 = vld [vmem:[%s2] sm:$0xff]
        %247 = vset.pattern.permute.xlu0 0
        %248 = vperm.xlu0 %247, %v245
        %v249 = vpop.permute.xlu0 %248
        %vm251 = vcmask 130048
        %v253 = vsel %vm251, %v244, 0
        %255 = vmatprep.subr.mxu0 0.0
        %256 = vmatpush1.msra.mxu0 %v242
        %257 = vmatprep.subr.mxu0 0.0
        %258 = vmatpush1.msra.mxu0 %v243
        %259 = vmatprep.subr.mxu0 0.0
        %260 = vmatpush1.msra.mxu0 0.0
        %261 = vmatprep.subr.mxu0 0.0
        %262 = vmatpush1.msra.mxu0 0.0
        %263 = vmatprep.subr.mxu0 0.0
        %264 = vmatpush1.msra.mxu0 0.0
        %265 = vmatprep.subr.mxu0 0.0
        %266 = vmatpush1.msra.mxu0 0.0
        %267 = vmatprep.subr.mxu0 0.0
        %268 = vmatpush1.msra.mxu0 0.0
        %269 = vmatprep.subr.mxu0 0.0
        %270 = vmatpush1.msra.mxu0 0.0
        %271 = vmatprep.subr.mxu0 0.0
        %272 = vmatpush1.msra.mxu0 0.0
        %273 = vmatprep.subr.mxu0 0.0
        %274 = vmatpush1.msra.mxu0 0.0
        %275 = vmatprep.subr.mxu0 0.0
        %276 = vmatpush1.msra.mxu0 0.0
        %277 = vmatprep.subr.mxu0 0.0
        %278 = vmatpush1.msra.mxu0 0.0
        %279 = vmatprep.subr.mxu0 0.0
        %280 = vmatpush1.msra.mxu0 0.0
        %281 = vmatprep.subr.mxu0 0.0
        %282 = vmatpush1.msra.mxu0 0.0
        %283 = vmatprep.subr.mxu0 0.0
        %284 = vmatpush1.msra.mxu0 0.0
        %285 = vmatprep.subr.mxu0 0.0
        %286 = vmatpush1.msra.mxu0 0.0
        %287 = vmatprep.subr.mxu0 0.0
        %288 = vmatpush1.msra.mxu0 0.0
        %289 = vmatprep.subr.mxu0 0.0
        %290 = vmatpush1.msra.mxu0 0.0
        %291 = vmatprep.subr.mxu0 0.0
        %292 = vmatpush1.msra.mxu0 0.0
        %293 = vmatprep.subr.mxu0 0.0
        %294 = vmatpush1.msra.mxu0 0.0
        %295 = vmatprep.subr.mxu0 0.0
        %296 = vmatpush1.msra.mxu0 0.0
        %297 = vmatprep.subr.mxu0 0.0
        %298 = vmatpush1.msra.mxu0 0.0
        %299 = vmatprep.subr.mxu0 0.0
        %300 = vmatpush1.msra.mxu0 0.0
        %301 = vmatprep.subr.mxu0 0.0
        %302 = vmatpush1.msra.mxu0 0.0
        %303 = vmatprep.subr.mxu0 0.0
        %304 = vmatpush1.msra.mxu0 0.0
        %305 = vmatprep.subr.mxu0 0.0
        %306 = vmatpush1.msra.mxu0 0.0
        %307 = vmatprep.subr.mxu0 0.0
        %308 = vmatpush1.msra.mxu0 0.0
        %309 = vmatprep.subr.mxu0 0.0
        %310 = vmatpush1.msra.mxu0 0.0
        %311 = vmatprep.subr.mxu0 0.0
        %312 = vmatpush1.msra.mxu0 0.0
        %313 = vmatprep.subr.mxu0 0.0
        %314 = vmatpush1.msra.mxu0 0.0
        %315 = vmatprep.subr.mxu0 0.0
        %316 = vmatpush1.msra.mxu0 0.0
        %317 = vmatprep.subr.mxu0 0.0
        %318 = vmatpush1.msra.mxu0 0.0
        %319 = vmatprep.mubr.f32.mxu0 0.0
        %320 = vmatmul.mubr.f32.gmra.mrb[0].mxu0 %v253
        %v321 = vpop.f32.mrb[0].mxu0
        %v322 = vadd.f32 %v249, %v321
        %v323 = vpop.f32.mrb[0].mxu0
        %324 = vdwg.mxu0
        %vm325 = vcmask 359424
        %326 = vst.msk [vmem:[%s233] sm:$0xff] %vm325, %v322
        %s327 = sand.u32 %s135, 1
        %s328 = scalar_lea.sflag [#allocation5], %s327
        %s329 = sand.u32 %s135, 1
        %s330 = smul.addr %s329, 8
        %s331 = scalar_lea.vmem [#allocation6], %s330
        // Predicated region
        $region41: #{tpu_custom_call.1} parent=35 // pred_check
          %p332 = pneg %p145
        $region42: #{tpu_custom_call.1} parent=35 // pred_check_branch
          %334 = sbr.rel (%p332) target = $region44
        $region43: #{tpu_custom_call.1} parent=35 // pred_region
          %s336 = ssub.s32 128, 128
          %337 = vsyncadd %s328, %s336
          %s338 = sadd.s32 %s27, %s26
          %s339 = smul.addr %s338, 128
          %s340 = scalar_lea.hbm %s4, %s339
          %s342 = sshll.u32 %s331, 4
          %s343 = int_to_ptr.vmem [resolvable:$true] %s342
          %345 = dma.vmem_to_hbm [thread:$0]  %s343, 128, %s340, %s328
        $region44: #{tpu_custom_call.1} parent=35 // pred_fallthru
          _
      $region36: #{tpu_custom_call.1} parent=5 // pred_fallthru
        _
      %p346 = scmp.le.s32.totalorder 2, %s17
      // Predicated region
      $region45: #{tpu_custom_call.1} parent=5 // pred_check
        %p347 = pneg %p346
      $region46: #{tpu_custom_call.1} parent=5 // pred_check_branch
        %349 = sbr.rel (%p347) target = $region48
      $region47: #{tpu_custom_call.1} parent=5 // pred_region
        %s350 = ssub.s32 %s17, 2
        // Predicated region
        $region49: #{tpu_custom_call.1} parent=47 // pred_check
          %p351 = pneg %p151
        $region50: #{tpu_custom_call.1} parent=47 // pred_check_branch
          %353 = sbr.rel (%p351) target = $region52
        $region51: #{tpu_custom_call.1} parent=47 // pred_region
          %s354 = sand.u32 %s136, 1
          %s355 = scalar_lea.sflag [#allocation5], %s354
          %s356 = sand.u32 %s136, 1
          %s357 = smul.addr %s356, 8
          %s358 = scalar_lea.vmem [#allocation6], %s357
          %359 = dma.done %s355, 128
        $region52: #{tpu_custom_call.1} parent=47 // pred_fallthru
          _
      $region48: #{tpu_custom_call.1} parent=5 // pred_fallthru
        _
    $region6: #{tpu_custom_call.1} parent=1 // loop_footer
      %s21 = sadd.s32 1, %s17
    $region7: #{tpu_custom_call.1} parent=1 // loop_footer_branch
      %16 = sbr.rel target = $region3
    $region8: #{tpu_custom_call.1} parent=1 // loop_exit
      _
    %360 = vsyncpa [#allocation4], 1
    %s361 = scalar_lea.sflag [#allocation4], 1
    %362 = vsyncpa %s361, 1
    %363 = vsyncpa [#allocation5], 1
    %s364 = scalar_lea.sflag [#allocation5], 1
    %365 = vsyncpa %s364, 1

</llo_original>
